<compile_context>
chip_gen: v7x
topology: tpu7x:2x2x1
jax: 0.10.0
libtpu: 0.0.40
codegen_flags: <defaults>
</compile_context>

<pallas_src>
import jax
import jax.numpy as jnp
from jax.experimental import pallas as pl
from jax.experimental.pallas import tpu as pltpu

EPS = 1e-5
_LANE = 128
_SUBLANE = 8
_VMEM_BUDGET = 32 * 1024 * 1024  # bytes; safe on v5e/v6e (128 MiB) and v7x (64 MiB)


def _round_up(a, b):
    return (a + b - 1) // b * b


def _patch_merge_kernel(x_ref, gamma_ref, beta_ref, w_ref, o_ref):
    # x_ref: (tm, K)   gamma/beta: (1, K)   w: (K, Npad)   o: (tm, Npad)
    x = x_ref[...].astype(jnp.float32)
    k = x.shape[-1]

    # Single-pass LayerNorm statistics (biased variance, like torch LayerNorm).
    inv_k = 1.0 / k
    s1 = jnp.sum(x, axis=-1, keepdims=True)
    s2 = jnp.sum(x * x, axis=-1, keepdims=True)
    mean = s1 * inv_k
    var = jnp.maximum(s2 * inv_k - mean * mean, 0.0)
    inv = jax.lax.rsqrt(var + EPS)

    xn = (x - mean) * inv
    xn = xn * gamma_ref[...].astype(jnp.float32) + beta_ref[...].astype(jnp.float32)

    # Reduction on the MXU: cast activations to the weight dtype (bf16 MXU
    # path on v6e/v7x if bf16 weights are used), accumulate in f32.
    y = jnp.dot(xn.astype(w_ref.dtype), w_ref[...],
                preferred_element_type=jnp.float32)
    o_ref[...] = y.astype(o_ref.dtype)


def _choose_tm(requested, M, K, Npad, x_itemsize, w_itemsize):
    """Largest row tile fitting the VMEM budget, with >=2 grid steps when possible."""
    tm = max(_SUBLANE, _round_up(requested, _SUBLANE))

    # Small-M case: cap the tile so the "parallel" grid still has >= 2 steps
    # that can be sharded across TensorCores (v7x megacore).
    if M <= tm:
        tm = max(_SUBLANE, _round_up(pl.cdiv(M, 2), _SUBLANE))

    def vmem_bytes(tm_):
        x_tiles = 2 * tm_ * K * x_itemsize        # double-buffered input tile
        o_tiles = 2 * tm_ * Npad * x_itemsize     # double-buffered output tile
        w_tiles = 2 * K * Npad * w_itemsize       # resident weight (worst case 2 bufs)
        gb_tiles = 4 * K * 4                      # gamma + beta
        return x_tiles + o_tiles + w_tiles + gb_tiles

    while tm > _SUBLANE and vmem_bytes(tm) > _VMEM_BUDGET - (2 << 20):
        tm = max(_SUBLANE, _round_up(tm // 2, _SUBLANE))
    return tm


def patch_merging_forward(x, H, W, gamma, beta, weight, *, tm=256):
    """x: (B, H*W, C); gamma/beta: (4C,); weight: (2C, 4C) torch-style."""
    B, L, C = x.shape
    assert L == H * W, "PatchMerging error"

    xhw = x.reshape(B, H, W, C)

    # Pad odd spatial dims with zeros (matches F.pad on bottom/right).
    pad_h, pad_w = H % 2, W % 2
    if pad_h or pad_w:
        xhw = jnp.pad(xhw, ((0, 0), (0, pad_h), (0, pad_w), (0, 0)))
    Hp, Wp = H + pad_h, W + pad_w

    x0 = xhw[:, 0::2, 0::2, :]
    x1 = xhw[:, 1::2, 0::2, :]
    x2 = xhw[:, 0::2, 1::2, :]
    x3 = xhw[:, 1::2, 1::2, :]
    xcat = jnp.concatenate([x0, x1, x2, x3], axis=-1)   # (B, Hp/2, Wp/2, 4C)

    M = B * (Hp // 2) * (Wp // 2)
    K = 4 * C
    N = 2 * C
    xmat = xcat.reshape(M, K)

    # Lane-dense / MXU-aligned output: pad N up to a multiple of 128.
    Npad = _round_up(N, _LANE)
    w = weight.T                                        # (4C, 2C)
    if Npad != N:
        w = jnp.pad(w, ((0, 0), (0, Npad - N)))

    tm_eff = _choose_tm(tm, M, K, Npad, x.dtype.itemsize, w.dtype.itemsize)

    Mpad = _round_up(M, tm_eff)
    if Mpad != M:
        xmat = jnp.pad(xmat, ((0, Mpad - M), (0, 0)))

    gamma2 = gamma.reshape(1, K)
    beta2 = beta.reshape(1, K)

    cost = pl.CostEstimate(
        flops=2 * Mpad * K * Npad,
        transcendentals=Mpad,
        bytes_accessed=(Mpad * K + Mpad * Npad) * x.dtype.itemsize
        + K * Npad * w.dtype.itemsize,
    )

    out = pl.pallas_call(
        _patch_merge_kernel,
        out_shape=jax.ShapeDtypeStruct((Mpad, Npad), x.dtype),
        grid_spec=pltpu.PrefetchScalarGridSpec(
            num_scalar_prefetch=0,
            grid=(Mpad // tm_eff,),
            in_specs=[
                pl.BlockSpec((tm_eff, K), lambda i: (i, 0)),
                pl.BlockSpec((1, K), lambda i: (0, 0)),      # gamma (grid-invariant)
                pl.BlockSpec((1, K), lambda i: (0, 0)),      # beta  (grid-invariant)
                pl.BlockSpec((K, Npad), lambda i: (0, 0)),   # weight (grid-invariant)
            ],
            out_specs=pl.BlockSpec((tm_eff, Npad), lambda i: (i, 0)),
        ),
        compiler_params=pltpu.CompilerParams(
            dimension_semantics=("parallel",),
            vmem_limit_bytes=_VMEM_BUDGET,
        ),
        cost_estimate=cost,
    )(xmat, gamma2, beta2, w)

    out = out[:M, :N]
    return out.reshape(B, (Hp // 2) * (Wp // 2), N)


def reference_forward(x, H, W, gamma, beta, weight):
    B, L, C = x.shape
    xhw = x.reshape(B, H, W, C)
    pad_h, pad_w = H % 2, W % 2
    if pad_h or pad_w:
        xhw = jnp.pad(xhw, ((0, 0), (0, pad_h), (0, pad_w), (0, 0)))
    x0 = xhw[:, 0::2, 0::2, :]
    x1 = xhw[:, 1::2, 0::2, :]
    x2 = xhw[:, 0::2, 1::2, :]
    x3 = xhw[:, 1::2, 1::2, :]
    xc = jnp.concatenate([x0, x1, x2, x3], axis=-1).reshape(B, -1, 4 * C)
    mean = jnp.mean(xc, axis=-1, keepdims=True)
    var = jnp.mean((xc - mean) ** 2, axis=-1, keepdims=True)
    xn = (xc - mean) * jax.lax.rsqrt(var + EPS) * gamma + beta
    return jnp.einsum("blk,nk->bln", xn, weight)


if __name__ == "__main__":
    key = jax.random.PRNGKey(0)
    B, H, W, dim = 2, 16, 16, 32            # x: (B, H*W, dim)
    k1, k2, k3, k4 = jax.random.split(key, 4)

    x = jax.random.normal(k1, (B, H * W, dim), dtype=jnp.float32)

    # Non-trivial LayerNorm params to exercise the affine path; Linear weight
    # is a small normal like the PyTorch init, torch layout (2C, 4C), no bias.
    gamma = 1.0 + 0.1 * jax.random.normal(k3, (4 * dim,), dtype=jnp.float32)
    beta = 0.1 * jax.random.normal(k4, (4 * dim,), dtype=jnp.float32)
    weight = 0.02 * jax.random.normal(k2, (2 * dim, 4 * dim), dtype=jnp.float32)

    out = patch_merging_forward(x, H, W, gamma, beta, weight)
    out = jax.block_until_ready(out)

    ref = reference_forward(x, H, W, gamma, beta, weight)
    assert out.shape == (B, (H // 2) * (W // 2), 2 * dim), out.shape
    assert jnp.allclose(out, ref, atol=2e-4, rtol=2e-4), "mismatch vs reference"

    print("KERNEL_OK")
</pallas_src>

<mosaic_0001>
module attributes {stable_mosaic.version = 11 : i64} {
  func.func @_patch_merge_kernel(%arg0: i32, %arg1: memref<64x128xf32, #tpu.memory_space<vmem>>, %arg2: memref<1x128xf32, #tpu.memory_space<vmem>>, %arg3: memref<1x128xf32, #tpu.memory_space<vmem>>, %arg4: memref<128x128xf32, #tpu.memory_space<vmem>>, %arg5: memref<64x128xf32, #tpu.memory_space<vmem>>) attributes {dimension_semantics = [#tpu.dimension_semantics<parallel>], iteration_bounds = array<i64: 2>, scalar_prefetch = 0 : i64, scratch_operands = 0 : i64, tpu.core_type = #tpu.core_type<tc>, window_params = [{transform_indices = @transform_0, window_bounds = array<i64: 64, 128>}, {pipeline_mode = #tpu.pipeline_mode<synchronous>, transform_indices = @transform_1, window_bounds = array<i64: 1, 128>}, {pipeline_mode = #tpu.pipeline_mode<synchronous>, transform_indices = @transform_2, window_bounds = array<i64: 1, 128>}, {pipeline_mode = #tpu.pipeline_mode<synchronous>, transform_indices = @transform_3, window_bounds = array<i64: 128, 128>}, {transform_indices = @transform_4, window_bounds = array<i64: 64, 128>}]} {
    %c0 = arith.constant 0 : index
    %c0_0 = arith.constant 0 : index
    %0 = vector.load %arg1[%c0, %c0_0] : memref<64x128xf32, #tpu.memory_space<vmem>>, vector<64x128xf32>
    %cst = arith.constant dense<0.000000e+00> : vector<64xf32>
    %1 = vector.multi_reduction <add>, %0, %cst [1] : vector<64x128xf32> to vector<64xf32>
    %2 = vector.shape_cast %1 : vector<64xf32> to vector<64x1xf32>
    %3 = arith.mulf %0, %0 : vector<64x128xf32>
    %cst_1 = arith.constant dense<0.000000e+00> : vector<64xf32>
    %4 = vector.multi_reduction <add>, %3, %cst_1 [1] : vector<64x128xf32> to vector<64xf32>
    %5 = vector.shape_cast %4 : vector<64xf32> to vector<64x1xf32>
    %cst_2 = arith.constant 7.812500e-03 : f32
    %6 = vector.broadcast %cst_2 : f32 to vector<64x1xf32>
    %7 = arith.mulf %2, %6 : vector<64x1xf32>
    %cst_3 = arith.constant 7.812500e-03 : f32
    %8 = vector.broadcast %cst_3 : f32 to vector<64x1xf32>
    %9 = arith.mulf %5, %8 : vector<64x1xf32>
    %10 = arith.mulf %7, %7 : vector<64x1xf32>
    %11 = arith.subf %9, %10 : vector<64x1xf32>
    %cst_4 = arith.constant 0.000000e+00 : f32
    %12 = vector.broadcast %cst_4 : f32 to vector<64x1xf32>
    %13 = arith.maximumf %11, %12 : vector<64x1xf32>
    %cst_5 = arith.constant 9.99999974E-6 : f32
    %14 = vector.broadcast %cst_5 : f32 to vector<64x1xf32>
    %15 = arith.addf %13, %14 : vector<64x1xf32>
    %16 = math.rsqrt %15 : vector<64x1xf32>
    %17 = vector.broadcast %7 : vector<64x1xf32> to vector<64x128xf32>
    %18 = arith.subf %0, %17 : vector<64x128xf32>
    %19 = vector.broadcast %16 : vector<64x1xf32> to vector<64x128xf32>
    %20 = arith.mulf %18, %19 : vector<64x128xf32>
    %c0_6 = arith.constant 0 : index
    %c0_7 = arith.constant 0 : index
    %21 = vector.load %arg2[%c0_6, %c0_7] : memref<1x128xf32, #tpu.memory_space<vmem>>, vector<1x128xf32>
    %22 = vector.broadcast %21 : vector<1x128xf32> to vector<64x128xf32>
    %23 = arith.mulf %20, %22 : vector<64x128xf32>
    %c0_8 = arith.constant 0 : index
    %c0_9 = arith.constant 0 : index
    %24 = vector.load %arg3[%c0_8, %c0_9] : memref<1x128xf32, #tpu.memory_space<vmem>>, vector<1x128xf32>
    %25 = vector.broadcast %24 : vector<1x128xf32> to vector<64x128xf32>
    %26 = arith.addf %23, %25 : vector<64x128xf32>
    %c0_10 = arith.constant 0 : index
    %c0_11 = arith.constant 0 : index
    %27 = vector.load %arg4[%c0_10, %c0_11] : memref<128x128xf32, #tpu.memory_space<vmem>>, vector<128x128xf32>
    %cst_12 = arith.constant dense<0.000000e+00> : vector<64x128xf32>
    %28 = tpu.matmul %26, %27, %cst_12 {dimension_numbers = #tpu.dot_dimension_numbers<[1], [0], [0], [1], [0, 0, 1, 1], [], []>} : vector<64x128xf32>, vector<128x128xf32>, vector<64x128xf32> -> vector<64x128xf32>
    %c0_13 = arith.constant 0 : index
    %c0_14 = arith.constant 0 : index
    %29 = vector.load %arg5[%c0_13, %c0_14] : memref<64x128xf32, #tpu.memory_space<vmem>>, vector<64x128xf32>
    tpu.vector_store %arg5[%c0_13, %c0_14], %28 {strides = array<i32>} : memref<64x128xf32, #tpu.memory_space<vmem>>, vector<64x128xf32>,
    return
  }
  func.func @transform_0(%arg0: i32) -> (i32, i32) {
    %c0_i32 = arith.constant 0 : i32
    %c0_i32_0 = arith.constant 0 : i32
    return %arg0, %c0_i32 : i32, i32
  }
  func.func @transform_1(%arg0: i32) -> (i32, i32) {
    %c0_i32 = arith.constant 0 : i32
    %c0_i32_0 = arith.constant 0 : i32
    %c0_i32_1 = arith.constant 0 : i32
    return %c0_i32, %c0_i32_0 : i32, i32
  }
  func.func @transform_2(%arg0: i32) -> (i32, i32) {
    %c0_i32 = arith.constant 0 : i32
    %c0_i32_0 = arith.constant 0 : i32
    %c0_i32_1 = arith.constant 0 : i32
    return %c0_i32, %c0_i32_0 : i32, i32
  }
  func.func @transform_3(%arg0: i32) -> (i32, i32) {
    %c0_i32 = arith.constant 0 : i32
    %c0_i32_0 = arith.constant 0 : i32
    %c0_i32_1 = arith.constant 0 : i32
    return %c0_i32, %c0_i32_0 : i32, i32
  }
  func.func @transform_4(%arg0: i32) -> (i32, i32) {
    %c0_i32 = arith.constant 0 : i32
    %c0_i32_0 = arith.constant 0 : i32
    return %arg0, %c0_i32 : i32, i32
  }
}

</mosaic_0001>

<llo_original>
// kernel: tpu_custom_call.1
$region0: #{tpu_custom_call.1}
  #allocation0 [shape = 'u32[]', space=smem, size = 0x4, offset = 0x4, fixed_abs, tag = 'smem constant byte address 0x4 - core index']
  #allocation1 [shape = 'u32[144,128]{1,0:T(1,128)}', space=vmem, size = 0x12000, scoped, tag = 'internal scratch']
  %s0 = inlined_call_operand.hbm [shape: f32[128,128], index: 0, kind: input, shape index: {}]
  %s1 = inlined_call_operand.vmem [shape: f32[1,128], index: 1, kind: input, shape index: {}]
  %s2 = inlined_call_operand.vmem [shape: f32[1,128], index: 2, kind: input, shape index: {}]
  %s3 = inlined_call_operand.hbm [shape: f32[128,128], index: 3, kind: input, shape index: {}]
  %s4 = inlined_call_operand.hbm [shape: f32[128,128], index: 4, kind: output, shape index: {}]
  %s5 = sld [smem:[#allocation0]]
  $region57: #{tpu_custom_call.1} parent=0
    _
  %s7 = ssub.s32 1, %s5
  %s8 = scalar_select 0, %s7, %s5
  $region1: #{tpu_custom_call.1} parent=0
    #allocation2 [shape = 'u8[65536]{0}', space=vmem, size = 0x10000, scoped, tag = 'input window, operand 0']
    #allocation3 [shape = 's32[2]{0}', space=sflag, size = 0x8, scoped, tag = 'scoped memory for tpu_custom_call.1']
    #allocation4 [shape = 's32[2]{0}', space=sflag, size = 0x8, scoped, tag = 'scoped memory for tpu_custom_call.1']
    #allocation5 [shape = 'u8[65536]{0}', space=vmem, size = 0x10000, scoped, tag = 'input window, operand 3, single buffered']
    #allocation6 [shape = 's32[1]{0}', space=sflag, size = 0x4, scoped, tag = 'scoped memory for tpu_custom_call.1']
    #allocation7 [shape = 'u8[65536]{0}', space=vmem, size = 0x10000, scoped, tag = 'output window, operand 0']
    %9 = vsyncpa [#allocation3], 0
    %s10 = scalar_lea.sflag [#allocation3], 1
    %11 = vsyncpa %s10, 0
    %12 = vsyncpa [#allocation6], 0
    %13 = vsyncpa [#allocation4], 0
    %s14 = scalar_lea.sflag [#allocation4], 1
    %15 = vsyncpa %s14, 0
    loop: start=0, step=1, limit=4
    $region2: #{tpu_custom_call.1} parent=1 // loop_pre_header
      _
    $region3: #{tpu_custom_call.1} parent=1 // loop_header
      %s17 = sphi 0, %s21
      %p18 = scmp.ge.s32.totalorder %s17, 4
      %s27 = sphi 0, %s29
      %s30 = sphi 0, %s27
      %s31 = sphi 0, %s30
      %s47 = sphi 0, %s31
      %s51 = sphi 0, %s51
      %s53 = sphi 0, %s51
      %s54 = sphi 0, %s53
      %s68 = sphi 0, %s54
      %s72 = sphi 0, %s72
      %s74 = sphi 0, %s72
      %s75 = sphi 0, %s74
      %s89 = sphi 0, %s75
      %s93 = sphi 0, %s93
      %s95 = sphi 0, %s93
      %s96 = sphi 0, %s95
      %s110 = sphi 0, %s96
      %s116 = sphi 0, %s118
      %s119 = sphi 0, %s116
      %s120 = sphi 0, %s119
      %s136 = sphi 0, %s120
    $region4: #{tpu_custom_call.1} parent=1 // loop_header_branch
      %20 = sbr.rel (%p18) target = $region8
    $region5: #{tpu_custom_call.1} parent=1 // loop_body
      %s22 = ssub.s32 %s17, 1
      %s23 = ssub.s32 %s17, 2
      %s24 = sadd.s32 %s17, 1
      %s25 = ssub.s32 %s17, %s24
      %p26 = scmp.eq.s32.totalorder %s25, 0
      %s28 = sadd.s32 %s27, 1
      %s29 = scalar_select %p26, %s27, %s28
      %p32 = pneg %p26
      %p33 = scmp.eq.s32.totalorder %s17, 1
      %p34 = por %p32, %p33
      %p35 = scmp.ne.s32.totalorder %s27, %s30
      %p36 = scmp.eq.s32.totalorder %s17, 0
      %p37 = por %p35, %p36
      %p38 = scmp.ne.s32.totalorder %s27, %s30
      %p39 = scmp.eq.s32.totalorder %s22, 1
      %p40 = por %p38, %p39
      %p41 = scmp.ne.s32.totalorder %s30, %s31
      %p42 = scmp.eq.s32.totalorder %s22, 0
      %p43 = por %p41, %p42
      %p44 = scmp.ne.s32.totalorder %s30, %s31
      %p45 = scmp.eq.s32.totalorder %s23, 1
      %p46 = por %p44, %p45
      %p48 = scmp.ne.s32.totalorder %s31, %s47
      %p49 = scmp.eq.s32.totalorder %s23, 0
      %p50 = por %p48, %p49
      %s52 = sadd.s32 %s51, 1
      %p55 = scmp.eq.s32.totalorder %s17, 1
      %p56 = scmp.ne.s32.totalorder %s51, %s53
      %p57 = scmp.eq.s32.totalorder %s17, 0
      %p58 = por %p56, %p57
      %p59 = scmp.ne.s32.totalorder %s51, %s53
      %p60 = scmp.eq.s32.totalorder %s22, 1
      %p61 = por %p59, %p60
      %p62 = scmp.ne.s32.totalorder %s53, %s54
      %p63 = scmp.eq.s32.totalorder %s22, 0
      %p64 = por %p62, %p63
      %p65 = scmp.ne.s32.totalorder %s53, %s54
      %p66 = scmp.eq.s32.totalorder %s23, 1
      %p67 = por %p65, %p66
      %p69 = scmp.ne.s32.totalorder %s54, %s68
      %p70 = scmp.eq.s32.totalorder %s23, 0
      %p71 = por %p69, %p70
      %s73 = sadd.s32 %s72, 1
      %p76 = scmp.eq.s32.totalorder %s17, 1
      %p77 = scmp.ne.s32.totalorder %s72, %s74
      %p78 = scmp.eq.s32.totalorder %s17, 0
      %p79 = por %p77, %p78
      %p80 = scmp.ne.s32.totalorder %s72, %s74
      %p81 = scmp.eq.s32.totalorder %s22, 1
      %p82 = por %p80, %p81
      %p83 = scmp.ne.s32.totalorder %s74, %s75
      %p84 = scmp.eq.s32.totalorder %s22, 0
      %p85 = por %p83, %p84
      %p86 = scmp.ne.s32.totalorder %s74, %s75
      %p87 = scmp.eq.s32.totalorder %s23, 1
      %p88 = por %p86, %p87
      %p90 = scmp.ne.s32.totalorder %s75, %s89
      %p91 = scmp.eq.s32.totalorder %s23, 0
      %p92 = por %p90, %p91
      %s94 = sadd.s32 %s93, 1
      %p97 = scmp.eq.s32.totalorder %s17, 1
      %p98 = scmp.ne.s32.totalorder %s93, %s95
      %p99 = scmp.eq.s32.totalorder %s17, 0
      %p100 = por %p98, %p99
      %p101 = scmp.ne.s32.totalorder %s93, %s95
      %p102 = scmp.eq.s32.totalorder %s22, 1
      %p103 = por %p101, %p102
      %p104 = scmp.ne.s32.totalorder %s95, %s96
      %p105 = scmp.eq.s32.totalorder %s22, 0
      %p106 = por %p104, %p105
      %p107 = scmp.ne.s32.totalorder %s95, %s96
      %p108 = scmp.eq.s32.totalorder %s23, 1
      %p109 = por %p107, %p108
      %p111 = scmp.ne.s32.totalorder %s96, %s110
      %p112 = scmp.eq.s32.totalorder %s23, 0
      %p113 = por %p111, %p112
      %s114 = ssub.s32 %s17, %s24
      %p115 = scmp.eq.s32.totalorder %s114, 0
      %s117 = sadd.s32 %s116, 1
      %s118 = scalar_select %p115, %s116, %s117
      %p121 = pneg %p115
      %p122 = scmp.eq.s32.totalorder %s17, 1
      %p123 = por %p121, %p122
      %p124 = scmp.ne.s32.totalorder %s116, %s119
      %p125 = scmp.eq.s32.totalorder %s17, 0
      %p126 = por %p124, %p125
      %p127 = scmp.ne.s32.totalorder %s116, %s119
      %p128 = scmp.eq.s32.totalorder %s22, 1
      %p129 = por %p127, %p128
      %p130 = scmp.ne.s32.totalorder %s119, %s120
      %p131 = scmp.eq.s32.totalorder %s22, 0
      %p132 = por %p130, %p131
      %p133 = scmp.ne.s32.totalorder %s119, %s120
      %p134 = scmp.eq.s32.totalorder %s23, 1
      %p135 = por %p133, %p134
      %p137 = scmp.ne.s32.totalorder %s120, %s136
      %p138 = scmp.eq.s32.totalorder %s23, 0
      %p139 = por %p137, %p138
      %p140 = scmp.le.s32.totalorder 1, %s17
      %p141 = scmp.lt.s32.totalorder %s17, 3
      %p142 = pnand %p140, %p141
      %p143 = pneg %p142
      // Predicated region
      $region9: #{tpu_custom_call.1} parent=5 // pred_check
        _
      $region10: #{tpu_custom_call.1} parent=5 // pred_check_branch
        %145 = sbr.rel (%p142) target = $region12
      $region11: #{tpu_custom_call.1} parent=5 // pred_region
        %s146 = ssub.s32 %s17, 1
        // Predicated region
        $region13: #{tpu_custom_call.1} parent=11 // pred_check
          %p147 = pneg %p64
        $region14: #{tpu_custom_call.1} parent=11 // pred_check_branch
          %149 = sbr.rel (%p147) target = $region16
        $region15: #{tpu_custom_call.1} parent=11 // pred_region
          _
        $region16: #{tpu_custom_call.1} parent=11 // pred_fallthru
          _
        // Predicated region
        $region17: #{tpu_custom_call.1} parent=11 // pred_check
          %p150 = pneg %p85
        $region18: #{tpu_custom_call.1} parent=11 // pred_check_branch
          %152 = sbr.rel (%p150) target = $region20
        $region19: #{tpu_custom_call.1} parent=11 // pred_region
          _
        $region20: #{tpu_custom_call.1} parent=11 // pred_fallthru
          _
        // Predicated region
        $region21: #{tpu_custom_call.1} parent=11 // pred_check
          %p153 = pneg %p106
        $region22: #{tpu_custom_call.1} parent=11 // pred_check_branch
          %155 = sbr.rel (%p153) target = $region24
        $region23: #{tpu_custom_call.1} parent=11 // pred_region
          %s157 = ssub.s32 2048, 2048
          %158 = vsyncadd [#allocation6], %s157
          %s159 = sshll.u32 [#allocation5], 4
          %s160 = int_to_ptr.vmem [resolvable:$true] %s159
          %165 = dma.hbm_to_vmem [thread:$0]  %s3, 2048, %s160, [#allocation6], 128, 128, 8
        $region24: #{tpu_custom_call.1} parent=11 // pred_fallthru
          _
      $region12: #{tpu_custom_call.1} parent=5 // pred_fallthru
        _
      %p166 = scmp.lt.s32.totalorder %s17, 2
      // Predicated region
      $region25: #{tpu_custom_call.1} parent=5 // pred_check
        %p167 = pneg %p166
      $region26: #{tpu_custom_call.1} parent=5 // pred_check_branch
        %169 = sbr.rel (%p167) target = $region28
      $region27: #{tpu_custom_call.1} parent=5 // pred_region
        // Predicated region
        $region29: #{tpu_custom_call.1} parent=27 // pred_check
          %p170 = pneg %p37
        $region30: #{tpu_custom_call.1} parent=27 // pred_check_branch
          %172 = sbr.rel (%p170) target = $region32
        $region31: #{tpu_custom_call.1} parent=27 // pred_region
          %s173 = sand.u32 %s27, 1
          %s174 = scalar_lea.sflag [#allocation3], %s173
          %s175 = sand.u32 %s27, 1
          %s176 = smul.addr %s175, 64
          %s177 = scalar_lea.vmem [#allocation2], %s176
          %s178 = smul.u32 8, %s17
          %s180 = ssub.s32 1024, 1024
          %181 = vsyncadd %s174, %s180
          %s182 = smul.addr %s178, 128
          %s183 = scalar_lea.hbm %s0, %s182
          %s184 = sshll.u32 %s177, 4
          %s185 = int_to_ptr.vmem [resolvable:$true] %s184
          %190 = dma.hbm_to_vmem [thread:$0]  %s183, 1024, %s185, %s174, 128, 128, 8
        $region32: #{tpu_custom_call.1} parent=27 // pred_fallthru
          _
      $region28: #{tpu_custom_call.1} parent=5 // pred_fallthru
        _
      %p191 = scmp.le.s32.totalorder 1, %s17
      %p192 = scmp.lt.s32.totalorder %s17, 3
      %p193 = pnand %p191, %p192
      %p194 = pneg %p193
      // Predicated region
      $region33: #{tpu_custom_call.1} parent=5 // pred_check
        _
      $region34: #{tpu_custom_call.1} parent=5 // pred_check_branch
        %196 = sbr.rel (%p193) target = $region36
      $region35: #{tpu_custom_call.1} parent=5 // pred_region
        %s197 = ssub.s32 %s17, 1
        %s198 = sand.u32 %s30, 1
        %s199 = scalar_lea.sflag [#allocation3], %s198
        %s200 = sand.u32 %s30, 1
        %s201 = smul.addr %s200, 64
        %s202 = scalar_lea.vmem [#allocation2], %s201
        // Predicated region
        $region37: #{tpu_custom_call.1} parent=35 // pred_check
          %p203 = pneg %p43
        $region38: #{tpu_custom_call.1} parent=35 // pred_check_branch
          %205 = sbr.rel (%p203) target = $region40
        $region39: #{tpu_custom_call.1} parent=35 // pred_region
          %206 = dma.done %s199, 1024
        $region40: #{tpu_custom_call.1} parent=35 // pred_fallthru
          _
        // Predicated region
        $region41: #{tpu_custom_call.1} parent=35 // pred_check
          %p207 = pneg %p106
        $region42: #{tpu_custom_call.1} parent=35 // pred_check_branch
          %209 = sbr.rel (%p207) target = $region44
        $region43: #{tpu_custom_call.1} parent=35 // pred_region
          %210 = dma.done [#allocation6], 2048
        $region44: #{tpu_custom_call.1} parent=35 // pred_fallthru
          _
        %s211 = sand.u32 %s30, 1
        %s212 = scalar_lea.sflag [#allocation3], %s211
        %s213 = sand.u32 %s30, 1
        %s214 = smul.addr %s213, 64
        %s215 = scalar_lea.vmem [#allocation2], %s214
        %p216 = pneg %p43
        %p217 = pneg %p40
        %p218 = pneg %p64
        %p219 = pneg %p61
        %p220 = pneg %p85
        %p221 = pneg %p82
        %p222 = pneg %p106
        %p223 = pneg %p103
        %p224 = pneg %p132
        %p225 = pneg %p129
        %s226 = sand.u32 %s119, 1
        %s227 = scalar_lea.sflag [#allocation4], %s226
        %s228 = sand.u32 %s119, 1
        %s229 = smul.addr %s228, 64
        %s230 = scalar_lea.vmem [#allocation7], %s229
        %s231 = smul.u32 8, %s22
        %s232 = smul.u32 8, %s22
        %v233 = vld [vmem:[%s202] sm:$0xff]
        %v234 = vld [vmem:[%s202 + $0x8] sm:$0xff]
        %v235 = vld [vmem:[%s202 + $0x10] sm:$0xff]
        %v236 = vld [vmem:[%s202 + $0x18] sm:$0xff]
        %v237 = vld [vmem:[%s202 + $0x20] sm:$0xff]
        %v238 = vld [vmem:[%s202 + $0x28] sm:$0xff]
        %v239 = vld [vmem:[%s202 + $0x30] sm:$0xff]
        %v240 = vld [vmem:[%s202 + $0x38] sm:$0xff]
        %241 = vadd.xlane.f32.xlu0 %v233
        %v242 = vpop.xlane.xlu0 %241
        %243 = vadd.xlane.f32.xlu0 %v234
        %v244 = vpop.xlane.xlu0 %243
        %245 = vadd.xlane.f32.xlu0 %v235
        %v246 = vpop.xlane.xlu0 %245
        %247 = vadd.xlane.f32.xlu0 %v236
        %v248 = vpop.xlane.xlu0 %247
        %249 = vadd.xlane.f32.xlu0 %v237
        %v250 = vpop.xlane.xlu0 %249
        %251 = vadd.xlane.f32.xlu0 %v238
        %v252 = vpop.xlane.xlu0 %251
        %253 = vadd.xlane.f32.xlu0 %v239
        %v254 = vpop.xlane.xlu0 %253
        %255 = vadd.xlane.f32.xlu0 %v240
        %v256 = vpop.xlane.xlu0 %255
        %v257 = vmul.f32 %v233, %v233
        %v258 = vmul.f32 %v234, %v234
        %v259 = vmul.f32 %v235, %v235
        %v260 = vmul.f32 %v236, %v236
        %v261 = vmul.f32 %v237, %v237
        %v262 = vmul.f32 %v238, %v238
        %v263 = vmul.f32 %v239, %v239
        %v264 = vmul.f32 %v240, %v240
        %265 = vadd.xlane.f32.xlu0 %v257
        %v266 = vpop.xlane.xlu0 %265
        %267 = vadd.xlane.f32.xlu0 %v258
        %v268 = vpop.xlane.xlu0 %267
        %269 = vadd.xlane.f32.xlu0 %v259
        %v270 = vpop.xlane.xlu0 %269
        %271 = vadd.xlane.f32.xlu0 %v260
        %v272 = vpop.xlane.xlu0 %271
        %273 = vadd.xlane.f32.xlu0 %v261
        %v274 = vpop.xlane.xlu0 %273
        %275 = vadd.xlane.f32.xlu0 %v262
        %v276 = vpop.xlane.xlu0 %275
        %277 = vadd.xlane.f32.xlu0 %v263
        %v278 = vpop.xlane.xlu0 %277
        %279 = vadd.xlane.f32.xlu0 %v264
        %v280 = vpop.xlane.xlu0 %279
        %v281 = vmul.f32 %v242, 0.0078125
        %v282 = vmul.f32 %v244, 0.0078125
        %v283 = vmul.f32 %v246, 0.0078125
        %v284 = vmul.f32 %v248, 0.0078125
        %v285 = vmul.f32 %v250, 0.0078125
        %v286 = vmul.f32 %v252, 0.0078125
        %v287 = vmul.f32 %v254, 0.0078125
        %v288 = vmul.f32 %v256, 0.0078125
        %v289 = vmul.f32 %v266, 0.0078125
        %v290 = vmul.f32 %v268, 0.0078125
        %v291 = vmul.f32 %v270, 0.0078125
        %v292 = vmul.f32 %v272, 0.0078125
        %v293 = vmul.f32 %v274, 0.0078125
        %v294 = vmul.f32 %v276, 0.0078125
        %v295 = vmul.f32 %v278, 0.0078125
        %v296 = vmul.f32 %v280, 0.0078125
        %v297 = vmul.f32 %v281, %v281
        %v298 = vmul.f32 %v282, %v282
        %v299 = vmul.f32 %v283, %v283
        %v300 = vmul.f32 %v284, %v284
        %v301 = vmul.f32 %v285, %v285
        %v302 = vmul.f32 %v286, %v286
        %v303 = vmul.f32 %v287, %v287
        %v304 = vmul.f32 %v288, %v288
        %v305 = vsub.f32 %v289, %v297
        %v306 = vsub.f32 %v290, %v298
        %v307 = vsub.f32 %v291, %v299
        %v308 = vsub.f32 %v292, %v300
        %v309 = vsub.f32 %v293, %v301
        %v310 = vsub.f32 %v294, %v302
        %v311 = vsub.f32 %v295, %v303
        %v312 = vsub.f32 %v296, %v304
        %v313 = vmax.f32 %v305, 0.0
        %v314 = vmax.f32 %v306, 0.0
        %v315 = vmax.f32 %v307, 0.0
        %v316 = vmax.f32 %v308, 0.0
        %v317 = vmax.f32 %v309, 0.0
        %v318 = vmax.f32 %v310, 0.0
        %v319 = vmax.f32 %v311, 0.0
        %v320 = vmax.f32 %v312, 0.0
        %v321 = vadd.f32 %v313, 1e-05
        %v322 = vadd.f32 %v314, 1e-05
        %v323 = vadd.f32 %v315, 1e-05
        %v324 = vadd.f32 %v316, 1e-05
        %v325 = vadd.f32 %v317, 1e-05
        %v326 = vadd.f32 %v318, 1e-05
        %v327 = vadd.f32 %v319, 1e-05
        %v328 = vadd.f32 %v320, 1e-05
        %v329 = vrsqrt.pop %v321
        %v330 = vrsqrt.pop %v322
        %v331 = vrsqrt.pop %v323
        %v332 = vrsqrt.pop %v324
        %v333 = vrsqrt.pop %v325
        %v334 = vrsqrt.pop %v326
        %v335 = vrsqrt.pop %v327
        %v336 = vrsqrt.pop %v328
        %v337 = vsub.f32 %v233, %v281
        %v338 = vsub.f32 %v234, %v282
        %v339 = vsub.f32 %v235, %v283
        %v340 = vsub.f32 %v236, %v284
        %v341 = vsub.f32 %v237, %v285
        %v342 = vsub.f32 %v238, %v286
        %v343 = vsub.f32 %v239, %v287
        %v344 = vsub.f32 %v240, %v288
        %v345 = vmul.f32 %v337, %v329
        %v346 = vmul.f32 %v338, %v330
        %v347 = vmul.f32 %v339, %v331
        %v348 = vmul.f32 %v340, %v332
        %v349 = vmul.f32 %v341, %v333
        %v350 = vmul.f32 %v342, %v334
        %v351 = vmul.f32 %v343, %v335
        %v352 = vmul.f32 %v344, %v336
        %v353 = vld [vmem:[%s1] sm:$0x1]
        %v355 = vlaneseq
        %v356 = vshrl.u32 %v355, 7
        %v357 = vsub.s32 0, %v356
        %v358 = vrot.slane %v353, %v357
        %v360 = vmul.f32 %v345, %v358
        %v361 = vmul.f32 %v346, %v358
        %v362 = vmul.f32 %v347, %v358
        %v363 = vmul.f32 %v348, %v358
        %v364 = vmul.f32 %v349, %v358
        %v365 = vmul.f32 %v350, %v358
        %v366 = vmul.f32 %v351, %v358
        %v367 = vmul.f32 %v352, %v358
        %v368 = vld [vmem:[%s2] sm:$0x1]
        %v370 = vlaneseq
        %v371 = vshrl.u32 %v370, 7
        %v372 = vsub.s32 0, %v371
        %v373 = vrot.slane %v368, %v372
        %v375 = vadd.f32 %v360, %v373
        %v376 = vadd.f32 %v361, %v373
        %v377 = vadd.f32 %v362, %v373
        %v378 = vadd.f32 %v363, %v373
        %v379 = vadd.f32 %v364, %v373
        %v380 = vadd.f32 %v365, %v373
        %v381 = vadd.f32 %v366, %v373
        %v382 = vadd.f32 %v367, %v373
        %v383 = vld [vmem:[#allocation5] sm:$0xff]
        %v384 = vld [vmem:[#allocation5 + $0x8] sm:$0xff]
        %v385 = vld [vmem:[#allocation5 + $0x10] sm:$0xff]
        %v386 = vld [vmem:[#allocation5 + $0x18] sm:$0xff]
        %v387 = vld [vmem:[#allocation5 + $0x20] sm:$0xff]
        %v388 = vld [vmem:[#allocation5 + $0x28] sm:$0xff]
        %v389 = vld [vmem:[#allocation5 + $0x30] sm:$0xff]
        %v390 = vld [vmem:[#allocation5 + $0x38] sm:$0xff]
        %v391 = vld [vmem:[#allocation5 + $0x40] sm:$0xff]
        %v392 = vld [vmem:[#allocation5 + $0x48] sm:$0xff]
        %v393 = vld [vmem:[#allocation5 + $0x50] sm:$0xff]
        %v394 = vld [vmem:[#allocation5 + $0x58] sm:$0xff]
        %v395 = vld [vmem:[#allocation5 + $0x60] sm:$0xff]
        %v396 = vld [vmem:[#allocation5 + $0x68] sm:$0xff]
        %v397 = vld [vmem:[#allocation5 + $0x70] sm:$0xff]
        %v398 = vld [vmem:[#allocation5 + $0x78] sm:$0xff]
        %399 = vmatprep.subr.mxu0 0.0
        %400 = vmatpush1.msra.mxu0 %v383
        %401 = vmatprep.subr.mxu0 0.0
        %402 = vmatpush1.msra.mxu0 %v384
        %403 = vmatprep.subr.mxu0 0.0
        %404 = vmatpush1.msra.mxu0 %v385
        %405 = vmatprep.subr.mxu0 0.0
        %406 = vmatpush1.msra.mxu0 %v386
        %407 = vmatprep.subr.mxu0 0.0
        %408 = vmatpush1.msra.mxu0 %v387
        %409 = vmatprep.subr.mxu0 0.0
        %410 = vmatpush1.msra.mxu0 %v388
        %411 = vmatprep.subr.mxu0 0.0
        %412 = vmatpush1.msra.mxu0 %v389
        %413 = vmatprep.subr.mxu0 0.0
        %414 = vmatpush1.msra.mxu0 %v390
        %415 = vmatprep.subr.mxu0 0.0
        %416 = vmatpush1.msra.mxu0 %v391
        %417 = vmatprep.subr.mxu0 0.0
        %418 = vmatpush1.msra.mxu0 %v392
        %419 = vmatprep.subr.mxu0 0.0
        %420 = vmatpush1.msra.mxu0 %v393
        %421 = vmatprep.subr.mxu0 0.0
        %422 = vmatpush1.msra.mxu0 %v394
        %423 = vmatprep.subr.mxu0 0.0
        %424 = vmatpush1.msra.mxu0 %v395
        %425 = vmatprep.subr.mxu0 0.0
        %426 = vmatpush1.msra.mxu0 %v396
        %427 = vmatprep.subr.mxu0 0.0
        %428 = vmatpush1.msra.mxu0 %v397
        %429 = vmatprep.subr.mxu0 0.0
        %430 = vmatpush1.msra.mxu0 %v398
        %431 = vmatprep.subr.mxu0 0.0
        %432 = vmatpush1.msra.mxu0 0.0
        %433 = vmatprep.subr.mxu0 0.0
        %434 = vmatpush1.msra.mxu0 0.0
        %435 = vmatprep.subr.mxu0 0.0
        %436 = vmatpush1.msra.mxu0 0.0
        %437 = vmatprep.subr.mxu0 0.0
        %438 = vmatpush1.msra.mxu0 0.0
        %439 = vmatprep.subr.mxu0 0.0
        %440 = vmatpush1.msra.mxu0 0.0
        %441 = vmatprep.subr.mxu0 0.0
        %442 = vmatpush1.msra.mxu0 0.0
        %443 = vmatprep.subr.mxu0 0.0
        %444 = vmatpush1.msra.mxu0 0.0
        %445 = vmatprep.subr.mxu0 0.0
        %446 = vmatpush1.msra.mxu0 0.0
        %447 = vmatprep.subr.mxu0 0.0
        %448 = vmatpush1.msra.mxu0 0.0
        %449 = vmatprep.subr.mxu0 0.0
        %450 = vmatpush1.msra.mxu0 0.0
        %451 = vmatprep.subr.mxu0 0.0
        %452 = vmatpush1.msra.mxu0 0.0
        %453 = vmatprep.subr.mxu0 0.0
        %454 = vmatpush1.msra.mxu0 0.0
        %455 = vmatprep.subr.mxu0 0.0
        %456 = vmatpush1.msra.mxu0 0.0
        %457 = vmatprep.subr.mxu0 0.0
        %458 = vmatpush1.msra.mxu0 0.0
        %459 = vmatprep.subr.mxu0 0.0
        %460 = vmatpush1.msra.mxu0 0.0
        %461 = vmatprep.subr.mxu0 0.0
        %462 = vmatpush1.msra.mxu0 0.0
        %463 = vmatprep.mubr.f32.mxu0 0.0
        %464 = vmatmul.mubr.f32.gmra.mrb[0].mxu0 %v375
        %v465 = vpop.f32.mrb[0].mxu0
        %v466 = vadd.f32 0.0, %v465
        %v467 = vpop.f32.mrb[0].mxu0
        %468 = vmatprep.mubr.f32.mxu0 0.0
        %469 = vmatmul.mubr.f32.gmra.mrb[0].mxu0 %v376
        %v470 = vpop.f32.mrb[0].mxu0
        %v471 = vadd.f32 0.0, %v470
        %v472 = vpop.f32.mrb[0].mxu0
        %473 = vmatprep.mubr.f32.mxu0 0.0
        %474 = vmatmul.mubr.f32.gmra.mrb[0].mxu0 %v377
        %v475 = vpop.f32.mrb[0].mxu0
        %v476 = vadd.f32 0.0, %v475
        %v477 = vpop.f32.mrb[0].mxu0
        %478 = vmatprep.mubr.f32.mxu0 0.0
        %479 = vmatmul.mubr.f32.gmra.mrb[0].mxu0 %v378
        %v480 = vpop.f32.mrb[0].mxu0
        %v481 = vadd.f32 0.0, %v480
        %v482 = vpop.f32.mrb[0].mxu0
        %483 = vmatprep.mubr.f32.mxu0 0.0
        %484 = vmatmul.mubr.f32.gmra.mrb[0].mxu0 %v379
        %v485 = vpop.f32.mrb[0].mxu0
        %v486 = vadd.f32 0.0, %v485
        %v487 = vpop.f32.mrb[0].mxu0
        %488 = vmatprep.mubr.f32.mxu0 0.0
        %489 = vmatmul.mubr.f32.gmra.mrb[0].mxu0 %v380
        %v490 = vpop.f32.mrb[0].mxu0
        %v491 = vadd.f32 0.0, %v490
        %v492 = vpop.f32.mrb[0].mxu0
        %493 = vmatprep.mubr.f32.mxu0 0.0
        %494 = vmatmul.mubr.f32.gmra.mrb[0].mxu0 %v381
        %v495 = vpop.f32.mrb[0].mxu0
        %v496 = vadd.f32 0.0, %v495
        %v497 = vpop.f32.mrb[0].mxu0
        %498 = vmatprep.mubr.f32.mxu0 0.0
        %499 = vmatmul.mubr.f32.gmra.mrb[0].mxu0 %v382
        %v500 = vpop.f32.mrb[0].mxu0
        %v501 = vadd.f32 0.0, %v500
        %v502 = vpop.f32.mrb[0].mxu0
        %503 = vdwg.mxu0
        %504 = vst [vmem:[%s230] sm:$0xff] %v466
        %505 = vst [vmem:[%s230 + $0x8] sm:$0xff] %v471
        %506 = vst [vmem:[%s230 + $0x10] sm:$0xff] %v476
        %507 = vst [vmem:[%s230 + $0x18] sm:$0xff] %v481
        %508 = vst [vmem:[%s230 + $0x20] sm:$0xff] %v486
        %509 = vst [vmem:[%s230 + $0x28] sm:$0xff] %v491
        %510 = vst [vmem:[%s230 + $0x30] sm:$0xff] %v496
        %511 = vst [vmem:[%s230 + $0x38] sm:$0xff] %v501
        %s512 = sand.u32 %s119, 1
        %s513 = scalar_lea.sflag [#allocation4], %s512
        %s514 = sand.u32 %s119, 1
        %s515 = smul.addr %s514, 64
        %s516 = scalar_lea.vmem [#allocation7], %s515
        // Predicated region
        $region45: #{tpu_custom_call.1} parent=35 // pred_check
          %p517 = pneg %p129
        $region46: #{tpu_custom_call.1} parent=35 // pred_check_branch
          %519 = sbr.rel (%p517) target = $region48
        $region47: #{tpu_custom_call.1} parent=35 // pred_region
          %s520 = smul.u32 8, %s22
          %s522 = ssub.s32 1024, 1024
          %523 = vsyncadd %s513, %s522
          %s524 = smul.addr %s520, 128
          %s525 = scalar_lea.hbm %s4, %s524
          %s526 = sshll.u32 %s516, 4
          %s527 = int_to_ptr.vmem [resolvable:$true] %s526
          %532 = dma.vmem_to_hbm [thread:$0]  %s527, 1024, %s525, %s513, 128, 128, 8
        $region48: #{tpu_custom_call.1} parent=35 // pred_fallthru
          _
      $region36: #{tpu_custom_call.1} parent=5 // pred_fallthru
        _
      %p533 = scmp.le.s32.totalorder 2, %s17
      // Predicated region
      $region49: #{tpu_custom_call.1} parent=5 // pred_check
        %p534 = pneg %p533
      $region50: #{tpu_custom_call.1} parent=5 // pred_check_branch
        %536 = sbr.rel (%p534) target = $region52
      $region51: #{tpu_custom_call.1} parent=5 // pred_region
        %s537 = ssub.s32 %s17, 2
        // Predicated region
        $region53: #{tpu_custom_call.1} parent=51 // pred_check
          %p538 = pneg %p135
        $region54: #{tpu_custom_call.1} parent=51 // pred_check_branch
          %540 = sbr.rel (%p538) target = $region56
        $region55: #{tpu_custom_call.1} parent=51 // pred_region
          %s541 = sand.u32 %s120, 1
          %s542 = scalar_lea.sflag [#allocation4], %s541
          %s543 = sand.u32 %s120, 1
          %s544 = smul.addr %s543, 64
          %s545 = scalar_lea.vmem [#allocation7], %s544
          %546 = dma.done %s542, 1024
        $region56: #{tpu_custom_call.1} parent=51 // pred_fallthru
          _
      $region52: #{tpu_custom_call.1} parent=5 // pred_fallthru
        _
    $region6: #{tpu_custom_call.1} parent=1 // loop_footer
      %s21 = sadd.s32 1, %s17
    $region7: #{tpu_custom_call.1} parent=1 // loop_footer_branch
      %16 = sbr.rel target = $region3
    $region8: #{tpu_custom_call.1} parent=1 // loop_exit
      _
    %547 = vsyncpa [#allocation3], 1
    %s548 = scalar_lea.sflag [#allocation3], 1
    %549 = vsyncpa %s548, 1
    %550 = vsyncpa [#allocation6], 1
    %551 = vsyncpa [#allocation4], 1
    %s552 = scalar_lea.sflag [#allocation4], 1
    %553 = vsyncpa %s552, 1

</llo_original>
